<compile_context>
chip_gen: v6e
topology: v6e:2x2x1
jax: 0.10.0
libtpu: 0.0.40
codegen_flags: <defaults>
</compile_context>

<pallas_src>
import functools
import math

import jax
import jax.numpy as jnp
from jax.experimental import pallas as pl
from jax.experimental.pallas import tpu as pltpu


def _vq_kernel(ze_ref, cb_ref, g_ref, zq_ref, idx_ref, loss_ref, *,
               inv_temperature, log_slots, width, tile_w):
    """One (batch, width-tile) grid step.

    ze_ref  : (D, TW)  activations, lane-dense in positions
    cb_ref  : (S, D)   codebook (constant block, stays VMEM-resident)
    g_ref   : (S, TW)  Gumbel(0,1) noise (bf16)
    zq_ref  : (D, TW)  quantized output
    idx_ref : (1, TW)  hard indices
    loss_ref: (2, 128) per-tile [kl_sum, commit_sum], broadcast across lanes
    """
    ze = ze_ref[...].astype(jnp.float32)
    cb = cb_ref[...].astype(jnp.float32)
    g = g_ref[...].astype(jnp.float32)
    s, tw = g.shape

    # distances^T = ||cb||^2 + ||ze||^2 - 2 * cb @ ze ; logits = -distances
    cb_sqr = jnp.sum(cb * cb, axis=1, keepdims=True)                # (S, 1)
    ze_sqr = jnp.sum(ze * ze, axis=0, keepdims=True)                # (1, TW)
    cross = jnp.dot(cb, ze, preferred_element_type=jnp.float32)     # (S, TW) MXU
    logits = 2.0 * cross - cb_sqr - ze_sqr                          # (S, TW)

    # exact softmax over slots (sublane axis)
    m = jnp.max(logits, axis=0, keepdims=True)                      # (1, TW)
    lm = logits - m
    e = jnp.exp(lm)
    sum_e = jnp.sum(e, axis=0, keepdims=True)                       # (1, TW)
    probs = e / sum_e                                               # exact

    # fused loss terms (uses sum_s probs == 1):
    #   kl_lane     = sum_s p*(log p + logK) = sum_s p*lm - log(sum_e) + logK
    #   commit_lane = sum_s p*dist = -sum_s p*logits = -(sum_s p*lm + m)
    plm = jnp.sum(probs * lm, axis=0, keepdims=True)                # (1, TW)
    kl_lane = plm - jnp.log(sum_e) + log_slots
    commit_lane = -(plm + m)

    # mask lanes past the true width (ragged last tile), reduce to scalars
    lane = jax.lax.broadcasted_iota(jnp.int32, (1, tw), 1)
    valid = lane < (width - pl.program_id(1) * tile_w)
    kl_sum = jnp.sum(jnp.where(valid, kl_lane, 0.0), axis=1, keepdims=True)
    commit_sum = jnp.sum(jnp.where(valid, commit_lane, 0.0),
                         axis=1, keepdims=True)
    loss_ref[...] = jnp.broadcast_to(
        jnp.concatenate([kl_sum, commit_sum], axis=0), loss_ref.shape)

    # RelaxedOneHotCategorical rsample: softmax((logits + gumbel) / temperature)
    y = (logits + g) * inv_temperature                              # (S, TW)
    my = jnp.max(y, axis=0, keepdims=True)
    ey = jnp.exp(y - my)
    soft_onehot = ey / jnp.sum(ey, axis=0, keepdims=True)           # (S, TW)

    # hard indices: softmax is monotone -> argmax(soft_onehot) == argmax(y);
    # first-index tie breaking.
    slot_ids = jax.lax.broadcasted_iota(jnp.int32, (s, tw), 0)
    idx = jnp.min(jnp.where(y == my, slot_ids, s), axis=0, keepdims=True)
    idx_ref[...] = idx.astype(jnp.int32)

    # z_q^T = codebook^T @ soft_onehot : (D, S) @ (S, TW) -> (D, TW)
    zq = jax.lax.dot_general(cb, soft_onehot, (((0,), (0,)), ((), ())),
                             preferred_element_type=jnp.float32)
    zq_ref[...] = zq.astype(zq_ref.dtype)


class VQCodebook:
    def __init__(self, codebook_dim=16, codebook_slots=32, temperature=0.5,
                 key=jax.random.PRNGKey(0)):
        self.codebook_dim = codebook_dim
        self.codebook_slots = codebook_slots
        self.temperature = temperature
        self.log_slots_const = math.log(codebook_slots)
        # nn.Embedding default init: N(0, 1)
        self.codebook = jax.random.normal(
            key, (codebook_slots, codebook_dim), dtype=jnp.float32)

    @staticmethod
    def sample_gumbel(key, bs, slots, w):
        # bf16 halves the largest HBM input; upcast to f32 inside the kernel.
        return jax.random.gumbel(
            key, (bs, slots, w), dtype=jnp.float32).astype(jnp.bfloat16)

    @staticmethod
    def _pick_tile(bs, w, tile_width):
        if tile_width is not None:
            tw = tile_width                 # caller-provided (multiple of 128 or == w)
        elif w <= 2048:
            tw = w                          # full width: one lane-dense block
        else:
            tw = 2048                       # multiple of 128; sweepable 1024-8192
        nw = pl.cdiv(w, tw)
        # keep >= 2 grid steps so both v7x TensorCores receive work
        if bs * nw < 2 and w >= 256:
            tw = 128 * pl.cdiv(pl.cdiv(w, 2), 128)
            nw = pl.cdiv(w, tw)
        return tw, nw

    def __call__(self, z_e, noise_key, soft=True, tile_width=None):
        # TODO(synk): only the soft=True (RelaxedOneHotCategorical) path is
        # implemented; the hard Categorical.sample() path is not.
        assert soft
        bs, d, w = z_e.shape
        assert d == self.codebook_dim
        s = self.codebook_slots
        tw, nw = self._pick_tile(bs, w, tile_width)

        gumbel = self.sample_gumbel(noise_key, bs, s, w)

        kernel = functools.partial(
            _vq_kernel,
            inv_temperature=1.0 / self.temperature,
            log_slots=self.log_slots_const,
            width=w,
            tile_w=tw,
        )

        zq, idx3, loss = pl.pallas_call(
            kernel,
            grid=(bs, nw),
            in_specs=[
                # activations, blocked (1, D, TW) -> kernel sees (D, TW)
                pl.BlockSpec((None, d, tw), lambda b, wi: (b, 0, wi)),
                # codebook: constant block, stays resident in VMEM
                pl.BlockSpec((s, d), lambda b, wi: (0, 0)),
                # gumbel noise, blocked like the activations
                pl.BlockSpec((None, s, tw), lambda b, wi: (b, 0, wi)),
            ],
            out_specs=[
                pl.BlockSpec((None, d, tw), lambda b, wi: (b, 0, wi)),
                pl.BlockSpec((None, 1, tw), lambda b, wi: (b, 0, wi)),
                pl.BlockSpec((None, 2, 128), lambda b, wi: (b, 0, wi)),
            ],
            out_shape=[
                jax.ShapeDtypeStruct((bs, d, w), z_e.dtype),      # z_q (NCW)
                jax.ShapeDtypeStruct((bs, 1, w), jnp.int32),      # hard indices
                jax.ShapeDtypeStruct((bs, 2, nw * 128), jnp.float32),  # per-tile losses
            ],
            compiler_params=pltpu.CompilerParams(
                dimension_semantics=("parallel", "parallel")),
        )(z_e, self.codebook, gumbel)

        hard_indices = idx3.reshape(bs, w)
        # per-tile scalars live at lanes 0, 128, 256, ... of the loss slab
        kl = jnp.sum(loss[:, 0, ::128]) / bs            # .sum(dim=(1,2)).mean()
        commit_loss = jnp.sum(loss[:, 1, ::128]) / bs
        return zq, hard_indices, kl, commit_loss


def _ref_forward(z_e, codebook, gumbel_bf16, temperature, log_slots):
    """Pure-JAX reference for the full soft=True forward (same gumbel noise)."""
    bs, d, w = z_e.shape
    s = codebook.shape[0]
    ze_flat = jnp.transpose(z_e, (0, 2, 1)).reshape(bs * w, d)
    cb_sqr = jnp.sum(codebook ** 2, axis=1)
    ze_sqr = jnp.sum(ze_flat ** 2, axis=1, keepdims=True)
    dist = cb_sqr[None, :] + ze_sqr - 2.0 * ze_flat @ codebook.T      # (bs*w, S)
    logits = -dist
    probs = jax.nn.softmax(logits, axis=1)
    kl = jnp.sum(probs * (jnp.log(probs + 1e-9) + log_slots)) / bs
    commit = jnp.sum(probs * dist) / bs
    g = jnp.transpose(gumbel_bf16.astype(jnp.float32), (0, 2, 1)).reshape(bs * w, s)
    y = (logits + g) / temperature
    soft_onehot = jax.nn.softmax(y, axis=1)
    idx = jnp.argmax(soft_onehot, axis=1).reshape(bs, w)
    zq = (soft_onehot @ codebook).reshape(bs, w, d).transpose(0, 2, 1)
    return zq, idx, kl, commit


if __name__ == "__main__":
    key = jax.random.PRNGKey(0)
    k_cb, k_x, k_noise, k_x2, k_noise2 = jax.random.split(key, 5)

    codebook_dim, codebook_slots = 16, 32
    vq = VQCodebook(codebook_dim=codebook_dim, codebook_slots=codebook_slots,
                    temperature=0.5, key=k_cb)

    # --- case 1: small demo shape (bs=2, D=16, w=8), single tile ---------------
    bs, w = 2, 8
    z_e = jax.random.normal(k_x, (bs, codebook_dim, w), dtype=jnp.float32)
    z_q, indices, kl, commit_loss = vq(z_e, k_noise, soft=True)
    jax.block_until_ready((z_q, indices, kl, commit_loss))

    assert z_q.shape == (bs, codebook_dim, w)
    assert indices.shape == (bs, w)
    assert kl.shape == () and commit_loss.shape == ()
    assert bool(jnp.all(jnp.isfinite(z_q)))
    assert bool(jnp.all((indices >= 0) & (indices < codebook_slots)))

    gumbel = VQCodebook.sample_gumbel(k_noise, bs, codebook_slots, w)
    zq_r, idx_r, kl_r, com_r = _ref_forward(
        z_e, vq.codebook, gumbel, vq.temperature, vq.log_slots_const)
    assert bool(jnp.allclose(z_q, zq_r, rtol=1e-3, atol=1e-3)), "z_q mismatch"
    assert float(jnp.mean((indices == idx_r).astype(jnp.float32))) >= 0.9, "idx"
    assert bool(jnp.allclose(kl, kl_r, rtol=5e-2, atol=1e-2)), (kl, kl_r)
    assert bool(jnp.allclose(commit_loss, com_r, rtol=5e-2, atol=1e-2)), (
        commit_loss, com_r)

    # --- case 2: multi-tile grid with a ragged last tile (masking path) --------
    bs2, w2 = 2, 200
    z_e2 = jax.random.normal(k_x2, (bs2, codebook_dim, w2), dtype=jnp.float32)
    z_q2, idx2, kl2, com2 = vq(z_e2, k_noise2, soft=True, tile_width=128)
    jax.block_until_ready((z_q2, idx2, kl2, com2))

    gumbel2 = VQCodebook.sample_gumbel(k_noise2, bs2, codebook_slots, w2)
    zq2_r, idx2_r, kl2_r, com2_r = _ref_forward(
        z_e2, vq.codebook, gumbel2, vq.temperature, vq.log_slots_const)
    assert bool(jnp.allclose(z_q2, zq2_r, rtol=1e-3, atol=1e-3)), "z_q2 mismatch"
    assert bool(jnp.allclose(kl2, kl2_r, rtol=5e-2, atol=1e-2)), (kl2, kl2_r)
    assert bool(jnp.allclose(com2, com2_r, rtol=5e-2, atol=1e-2)), (com2, com2_r)
    assert bool(jnp.all((idx2 >= 0) & (idx2 < codebook_slots)))

    print("KERNEL_OK")
</pallas_src>

<mosaic_0001>
module attributes {stable_mosaic.version = 11 : i64} {
  func.func @_vq_kernel(%arg0: i32, %arg1: i32, %arg2: memref<1x16x8xf32, #tpu.memory_space<vmem>>, %arg3: memref<32x16xf32, #tpu.memory_space<vmem>>, %arg4: memref<1x32x8xbf16, #tpu.memory_space<vmem>>, %arg5: memref<1x16x8xf32, #tpu.memory_space<vmem>>, %arg6: memref<1x1x8xi32, #tpu.memory_space<vmem>>, %arg7: memref<1x2x128xf32, #tpu.memory_space<vmem>>) attributes {dimension_semantics = [#tpu.dimension_semantics<parallel>, #tpu.dimension_semantics<parallel>], iteration_bounds = array<i64: 2, 1>, scalar_prefetch = 0 : i64, scratch_operands = 0 : i64, tpu.core_type = #tpu.core_type<tc>, window_params = [{transform_indices = @transform_0, window_bounds = array<i64: 1, 16, 8>}, {pipeline_mode = #tpu.pipeline_mode<synchronous>, transform_indices = @transform_1, window_bounds = array<i64: 32, 16>}, {transform_indices = @transform_2, window_bounds = array<i64: 1, 32, 8>}, {transform_indices = @transform_3, window_bounds = array<i64: 1, 16, 8>}, {transform_indices = @transform_4, window_bounds = array<i64: 1, 1, 8>}, {transform_indices = @transform_5, window_bounds = array<i64: 1, 2, 128>}]} {
    %c0 = arith.constant 0 : index
    %c0_0 = arith.constant 0 : index
    %c0_1 = arith.constant 0 : index
    %0 = vector.load %arg2[%c0, %c0_0, %c0_1] : memref<1x16x8xf32, #tpu.memory_space<vmem>>, vector<1x16x8xf32>
    %1 = vector.shape_cast %0 : vector<1x16x8xf32> to vector<16x8xf32>
    %c0_2 = arith.constant 0 : index
    %c0_3 = arith.constant 0 : index
    %2 = vector.load %arg3[%c0_2, %c0_3] : memref<32x16xf32, #tpu.memory_space<vmem>>, vector<32x16xf32>
    %c0_4 = arith.constant 0 : index
    %c0_5 = arith.constant 0 : index
    %c0_6 = arith.constant 0 : index
    %3 = vector.load %arg4[%c0_4, %c0_5, %c0_6] : memref<1x32x8xbf16, #tpu.memory_space<vmem>>, vector<1x32x8xbf16>
    %4 = vector.shape_cast %3 : vector<1x32x8xbf16> to vector<32x8xbf16>
    %5 = arith.extf %4 : vector<32x8xbf16> to vector<32x8xf32>
    %6 = arith.mulf %2, %2 : vector<32x16xf32>
    %cst = arith.constant dense<0.000000e+00> : vector<32xf32>
    %7 = vector.multi_reduction <add>, %6, %cst [1] : vector<32x16xf32> to vector<32xf32>
    %8 = vector.shape_cast %7 : vector<32xf32> to vector<32x1xf32>
    %9 = arith.mulf %1, %1 : vector<16x8xf32>
    %cst_7 = arith.constant dense<0.000000e+00> : vector<8xf32>
    %10 = vector.multi_reduction <add>, %9, %cst_7 [0] : vector<16x8xf32> to vector<8xf32>
    %11 = vector.shape_cast %10 : vector<8xf32> to vector<1x8xf32>
    %cst_8 = arith.constant dense<0.000000e+00> : vector<32x8xf32>
    %12 = tpu.matmul %2, %1, %cst_8 {dimension_numbers = #tpu.dot_dimension_numbers<[1], [0], [0], [1], [0, 0, 1, 1], [], []>} : vector<32x16xf32>, vector<16x8xf32>, vector<32x8xf32> -> vector<32x8xf32>
    %cst_9 = arith.constant 2.000000e+00 : f32
    %13 = vector.broadcast %cst_9 : f32 to vector<32x8xf32>
    %14 = arith.mulf %13, %12 : vector<32x8xf32>
    %15 = vector.broadcast %8 : vector<32x1xf32> to vector<32x8xf32>
    %16 = arith.subf %14, %15 : vector<32x8xf32>
    %17 = vector.broadcast %11 : vector<1x8xf32> to vector<32x8xf32>
    %18 = arith.subf %16, %17 : vector<32x8xf32>
    %cst_10 = arith.constant dense<0xFF800000> : vector<8xf32>
    %19 = vector.multi_reduction <maximumf>, %18, %cst_10 [0] : vector<32x8xf32> to vector<8xf32>
    %20 = vector.shape_cast %19 : vector<8xf32> to vector<1x8xf32>
    %21 = vector.broadcast %20 : vector<1x8xf32> to vector<32x8xf32>
    %22 = arith.subf %18, %21 : vector<32x8xf32>
    %23 = math.exp %22 : vector<32x8xf32>
    %cst_11 = arith.constant dense<0.000000e+00> : vector<8xf32>
    %24 = vector.multi_reduction <add>, %23, %cst_11 [0] : vector<32x8xf32> to vector<8xf32>
    %25 = vector.shape_cast %24 : vector<8xf32> to vector<1x8xf32>
    %26 = vector.broadcast %25 : vector<1x8xf32> to vector<32x8xf32>
    %27 = arith.divf %23, %26 : vector<32x8xf32>
    %28 = arith.mulf %27, %22 : vector<32x8xf32>
    %cst_12 = arith.constant dense<0.000000e+00> : vector<8xf32>
    %29 = vector.multi_reduction <add>, %28, %cst_12 [0] : vector<32x8xf32> to vector<8xf32>
    %30 = vector.shape_cast %29 : vector<8xf32> to vector<1x8xf32>
    %31 = math.log %25 : vector<1x8xf32>
    %32 = arith.subf %30, %31 : vector<1x8xf32>
    %cst_13 = arith.constant 3.46573591 : f32
    %33 = vector.broadcast %cst_13 : f32 to vector<1x8xf32>
    %34 = arith.addf %32, %33 : vector<1x8xf32>
    %35 = arith.addf %30, %20 : vector<1x8xf32>
    %cst_14 = arith.constant 0.000000e+00 : f32
    %36 = vector.broadcast %cst_14 : f32 to vector<1x8xf32>
    %37 = arith.subf %36, %35 : vector<1x8xf32>
    %38 = tpu.iota {dimensions = array<i32: 1>} : vector<1x8xi32>
    %c8_i32 = arith.constant 8 : i32
    %39 = arith.muli %arg1, %c8_i32 : i32
    %c8_i32_15 = arith.constant 8 : i32
    %40 = arith.subi %c8_i32_15, %39 : i32
    %41 = vector.broadcast %40 : i32 to vector<1x8xi32>
    %42 = arith.cmpi slt, %38, %41 : vector<1x8xi32>
    %cst_16 = arith.constant 0.000000e+00 : f32
    %43 = vector.broadcast %cst_16 : f32 to vector<1x8xf32>
    %44 = arith.select %42, %34, %43 : vector<1x8xi1>, vector<1x8xf32>
    %cst_17 = arith.constant dense<0.000000e+00> : vector<1xf32>
    %45 = vector.multi_reduction <add>, %44, %cst_17 [1] : vector<1x8xf32> to vector<1xf32>
    %46 = vector.shape_cast %45 : vector<1xf32> to vector<1x1xf32>
    %cst_18 = arith.constant 0.000000e+00 : f32
    %47 = vector.broadcast %cst_18 : f32 to vector<1x8xf32>
    %48 = arith.select %42, %37, %47 : vector<1x8xi1>, vector<1x8xf32>
    %cst_19 = arith.constant dense<0.000000e+00> : vector<1xf32>
    %49 = vector.multi_reduction <add>, %48, %cst_19 [1] : vector<1x8xf32> to vector<1xf32>
    %50 = vector.shape_cast %49 : vector<1xf32> to vector<1x1xf32>
    %51 = tpu.concatenate %46, %50 in 0 : vector<1x1xf32>, vector<1x1xf32> -> vector<2x1xf32>
    %52 = vector.shape_cast %51 : vector<2x1xf32> to vector<2x1xf32>
    %53 = vector.broadcast %52 : vector<2x1xf32> to vector<2x128xf32>
    %c0_20 = arith.constant 0 : index
    %c0_21 = arith.constant 0 : index
    %c0_22 = arith.constant 0 : index
    %54 = vector.load %arg7[%c0_20, %c0_21, %c0_22] : memref<1x2x128xf32, #tpu.memory_space<vmem>>, vector<1x2x128xf32>
    %55 = vector.shape_cast %54 : vector<1x2x128xf32> to vector<2x128xf32>
    %56 = vector.shape_cast %53 : vector<2x128xf32> to vector<1x2x128xf32>
    tpu.vector_store %arg7[%c0_20, %c0_21, %c0_22], %56 {strides = array<i32>} : memref<1x2x128xf32, #tpu.memory_space<vmem>>, vector<1x2x128xf32>,
    %57 = arith.addf %18, %5 : vector<32x8xf32>
    %cst_23 = arith.constant 2.000000e+00 : f32
    %58 = vector.broadcast %cst_23 : f32 to vector<32x8xf32>
    %59 = arith.mulf %57, %58 : vector<32x8xf32>
    %cst_24 = arith.constant dense<0xFF800000> : vector<8xf32>
    %60 = vector.multi_reduction <maximumf>, %59, %cst_24 [0] : vector<32x8xf32> to vector<8xf32>
    %61 = vector.shape_cast %60 : vector<8xf32> to vector<1x8xf32>
    %62 = vector.broadcast %61 : vector<1x8xf32> to vector<32x8xf32>
    %63 = arith.subf %59, %62 : vector<32x8xf32>
    %64 = math.exp %63 : vector<32x8xf32>
    %cst_25 = arith.constant dense<0.000000e+00> : vector<8xf32>
    %65 = vector.multi_reduction <add>, %64, %cst_25 [0] : vector<32x8xf32> to vector<8xf32>
    %66 = vector.shape_cast %65 : vector<8xf32> to vector<1x8xf32>
    %67 = vector.broadcast %66 : vector<1x8xf32> to vector<32x8xf32>
    %68 = arith.divf %64, %67 : vector<32x8xf32>
    %69 = tpu.iota {dimensions = array<i32: 0>} : vector<32x8xi32>
    %70 = vector.broadcast %61 : vector<1x8xf32> to vector<32x8xf32>
    %71 = arith.cmpf oeq, %59, %70 : vector<32x8xf32>
    %c32_i32 = arith.constant 32 : i32
    %72 = vector.broadcast %c32_i32 : i32 to vector<32x8xi32>
    %73 = arith.select %71, %69, %72 : vector<32x8xi1>, vector<32x8xi32>
    %cst_26 = arith.constant dense<2147483647> : vector<8xi32>
    %74 = vector.multi_reduction <minsi>, %73, %cst_26 [0] : vector<32x8xi32> to vector<8xi32>
    %75 = vector.shape_cast %74 : vector<8xi32> to vector<1x8xi32>
    %c0_27 = arith.constant 0 : index
    %c0_28 = arith.constant 0 : index
    %c0_29 = arith.constant 0 : index
    %76 = vector.load %arg6[%c0_27, %c0_28, %c0_29] : memref<1x1x8xi32, #tpu.memory_space<vmem>>, vector<1x1x8xi32>
    %77 = vector.shape_cast %76 : vector<1x1x8xi32> to vector<1x8xi32>
    %78 = vector.shape_cast %75 : vector<1x8xi32> to vector<1x1x8xi32>
    tpu.vector_store %arg6[%c0_27, %c0_28, %c0_29], %78 {strides = array<i32>} : memref<1x1x8xi32, #tpu.memory_space<vmem>>, vector<1x1x8xi32>,
    %cst_30 = arith.constant dense<0.000000e+00> : vector<16x8xf32>
    %79 = tpu.matmul %2, %68, %cst_30 {dimension_numbers = #tpu.dot_dimension_numbers<[0], [0], [1], [1], [0, 1, 1, 1], [], []>} : vector<32x16xf32>, vector<32x8xf32>, vector<16x8xf32> -> vector<16x8xf32>
    %c0_31 = arith.constant 0 : index
    %c0_32 = arith.constant 0 : index
    %c0_33 = arith.constant 0 : index
    %80 = vector.load %arg5[%c0_31, %c0_32, %c0_33] : memref<1x16x8xf32, #tpu.memory_space<vmem>>, vector<1x16x8xf32>
    %81 = vector.shape_cast %80 : vector<1x16x8xf32> to vector<16x8xf32>
    %82 = vector.shape_cast %79 : vector<16x8xf32> to vector<1x16x8xf32>
    tpu.vector_store %arg5[%c0_31, %c0_32, %c0_33], %82 {strides = array<i32>} : memref<1x16x8xf32, #tpu.memory_space<vmem>>, vector<1x16x8xf32>,
    return
  }
  func.func @transform_0(%arg0: i32, %arg1: i32) -> (i32, i32, i32) {
    %c0_i32 = arith.constant 0 : i32
    %c0_i32_0 = arith.constant 0 : i32
    return %arg0, %c0_i32, %arg1 : i32, i32, i32
  }
  func.func @transform_1(%arg0: i32, %arg1: i32) -> (i32, i32) {
    %c0_i32 = arith.constant 0 : i32
    %c0_i32_0 = arith.constant 0 : i32
    %c0_i32_1 = arith.constant 0 : i32
    return %c0_i32, %c0_i32_0 : i32, i32
  }
  func.func @transform_2(%arg0: i32, %arg1: i32) -> (i32, i32, i32) {
    %c0_i32 = arith.constant 0 : i32
    %c0_i32_0 = arith.constant 0 : i32
    return %arg0, %c0_i32, %arg1 : i32, i32, i32
  }
  func.func @transform_3(%arg0: i32, %arg1: i32) -> (i32, i32, i32) {
    %c0_i32 = arith.constant 0 : i32
    %c0_i32_0 = arith.constant 0 : i32
    return %arg0, %c0_i32, %arg1 : i32, i32, i32
  }
  func.func @transform_4(%arg0: i32, %arg1: i32) -> (i32, i32, i32) {
    %c0_i32 = arith.constant 0 : i32
    %c0_i32_0 = arith.constant 0 : i32
    return %arg0, %c0_i32, %arg1 : i32, i32, i32
  }
  func.func @transform_5(%arg0: i32, %arg1: i32) -> (i32, i32, i32) {
    %c0_i32 = arith.constant 0 : i32
    %c0_i32_0 = arith.constant 0 : i32
    return %arg0, %c0_i32, %arg1 : i32, i32, i32
  }
}

</mosaic_0001>

<llo_original>
// kernel: tpu_custom_call.1
$region0: #{tpu_custom_call.1}
  #allocation0 [shape = 'u32[]', space=smem, size = 0x4, offset = 0x4, fixed_abs, tag = 'smem constant byte address 0x4 - core index']
  #allocation1 [shape = 'u32[144,128]{1,0:T(1,128)}', space=vmem, size = 0x12000, scoped, tag = 'internal scratch']
  %s0 = inlined_call_operand.vmem [shape: f32[2,16,8], index: 0, kind: input, shape index: {}]
  %s1 = inlined_call_operand.vmem [shape: f32[32,16], index: 1, kind: input, shape index: {}]
  %s2 = inlined_call_operand.vmem [shape: bf16[2,32,8], index: 2, kind: input, shape index: {}]
  %s3 = inlined_call_operand.vmem [shape: f32[2,16,8], index: 3, kind: output, shape index: {0}]
  %s4 = inlined_call_operand.hbm [shape: s32[2,1,8], index: 4, kind: output, shape index: {1}]
  %s5 = inlined_call_operand.hbm [shape: f32[2,2,128], index: 5, kind: output, shape index: {2}]
  %6 = xla_tuple %s3, %s4, %s5
  %s7 = sld [smem:[#allocation0]]
  $region61: #{tpu_custom_call.1} parent=0
    _
  %s9 = ssub.s32 1, %s7
  %s10 = scalar_select 0, %s9, %s7
  $region1: #{tpu_custom_call.1} parent=0
    #allocation2 [shape = 'u8[1024]{0}', space=vmem, size = 0x400, scoped, tag = 'output window, operand 1']
    #allocation3 [shape = 's32[2]{0}', space=sflag, size = 0x8, scoped, tag = 'scoped memory for tpu_custom_call.1']
    #allocation4 [shape = 'u8[2048]{0}', space=vmem, size = 0x800, scoped, tag = 'output window, operand 2']
    #allocation5 [shape = 's32[2]{0}', space=sflag, size = 0x8, scoped, tag = 'scoped memory for tpu_custom_call.1']
    %11 = vsyncpa [#allocation3], 0
    %s12 = scalar_lea.sflag [#allocation3], 1
    %13 = vsyncpa %s12, 0
    %14 = vsyncpa [#allocation5], 0
    %s15 = scalar_lea.sflag [#allocation5], 1
    %16 = vsyncpa %s15, 0
    loop: start=0, step=1, limit=4
    $region2: #{tpu_custom_call.1} parent=1 // loop_pre_header
      _
    $region3: #{tpu_custom_call.1} parent=1 // loop_header
      %s18 = sphi 0, %s22
      %p19 = scmp.ge.s32.totalorder %s18, 4
      %s25 = sphi 0, %s37
      %s26 = sphi 0, %s33
      %s27 = sphi 0, %s25
      %s28 = sphi 0, %s26
      %s29 = sphi 0, %s27
      %s30 = sphi 0, %s28
      %s42 = sphi 0, %s44
      %s45 = sphi 0, %s42
      %s46 = sphi 0, %s45
      %s62 = sphi 0, %s46
      %s66 = sphi 0, %s66
      %s68 = sphi 0, %s66
      %s69 = sphi 0, %s68
      %s83 = sphi 0, %s69
      %s91 = sphi 0, %s93
      %s94 = sphi 0, %s91
      %s95 = sphi 0, %s94
      %s111 = sphi 0, %s95
      %s119 = sphi 0, %s121
      %s122 = sphi 0, %s119
      %s123 = sphi 0, %s122
      %s139 = sphi 0, %s123
      %s147 = sphi 0, %s149
      %s150 = sphi 0, %s147
      %s151 = sphi 0, %s150
      %s167 = sphi 0, %s151
      %s175 = sphi 0, %s177
      %s178 = sphi 0, %s175
      %s179 = sphi 0, %s178
      %s195 = sphi 0, %s179
    $region4: #{tpu_custom_call.1} parent=1 // loop_header_branch
      %21 = sbr.rel (%p19) target = $region8
    $region5: #{tpu_custom_call.1} parent=1 // loop_body
      %s23 = ssub.s32 %s18, 1
      %s24 = ssub.s32 %s18, 2
      %s31 = sadd.s32 1, %s26
      %p32 = scmp.ge.s32.totalorder %s31, 1
      %s33 = scalar_select %p32, 0, %s31
      %s34 = sadd.s32 1, %s25
      %s35 = scalar_select %p32, %s34, %s25
      %p36 = scmp.ge.s32.totalorder %s35, 2
      %s37 = scalar_select %p36, 0, %s35
      %s38 = ssub.s32 %s25, %s37
      %s39 = ssub.s32 %s26, %s33
      %s40 = sor.u32 %s38, %s39
      %p41 = scmp.eq.s32.totalorder %s40, 0
      %s43 = sadd.s32 %s42, 1
      %s44 = scalar_select %p41, %s42, %s43
      %p47 = pneg %p41
      %p48 = scmp.eq.s32.totalorder %s18, 1
      %p49 = por %p47, %p48
      %p50 = scmp.ne.s32.totalorder %s42, %s45
      %p51 = scmp.eq.s32.totalorder %s18, 0
      %p52 = por %p50, %p51
      %p53 = scmp.ne.s32.totalorder %s42, %s45
      %p54 = scmp.eq.s32.totalorder %s23, 1
      %p55 = por %p53, %p54
      %p56 = scmp.ne.s32.totalorder %s45, %s46
      %p57 = scmp.eq.s32.totalorder %s23, 0
      %p58 = por %p56, %p57
      %p59 = scmp.ne.s32.totalorder %s45, %s46
      %p60 = scmp.eq.s32.totalorder %s24, 1
      %p61 = por %p59, %p60
      %p63 = scmp.ne.s32.totalorder %s46, %s62
      %p64 = scmp.eq.s32.totalorder %s24, 0
      %p65 = por %p63, %p64
      %s67 = sadd.s32 %s66, 1
      %p70 = scmp.eq.s32.totalorder %s18, 1
      %p71 = scmp.ne.s32.totalorder %s66, %s68
      %p72 = scmp.eq.s32.totalorder %s18, 0
      %p73 = por %p71, %p72
      %p74 = scmp.ne.s32.totalorder %s66, %s68
      %p75 = scmp.eq.s32.totalorder %s23, 1
      %p76 = por %p74, %p75
      %p77 = scmp.ne.s32.totalorder %s68, %s69
      %p78 = scmp.eq.s32.totalorder %s23, 0
      %p79 = por %p77, %p78
      %p80 = scmp.ne.s32.totalorder %s68, %s69
      %p81 = scmp.eq.s32.totalorder %s24, 1
      %p82 = por %p80, %p81
      %p84 = scmp.ne.s32.totalorder %s69, %s83
      %p85 = scmp.eq.s32.totalorder %s24, 0
      %p86 = por %p84, %p85
      %s87 = ssub.s32 %s25, %s37
      %s88 = ssub.s32 %s26, %s33
      %s89 = sor.u32 %s87, %s88
      %p90 = scmp.eq.s32.totalorder %s89, 0
      %s92 = sadd.s32 %s91, 1
      %s93 = scalar_select %p90, %s91, %s92
      %p96 = pneg %p90
      %p97 = scmp.eq.s32.totalorder %s18, 1
      %p98 = por %p96, %p97
      %p99 = scmp.ne.s32.totalorder %s91, %s94
      %p100 = scmp.eq.s32.totalorder %s18, 0
      %p101 = por %p99, %p100
      %p102 = scmp.ne.s32.totalorder %s91, %s94
      %p103 = scmp.eq.s32.totalorder %s23, 1
      %p104 = por %p102, %p103
      %p105 = scmp.ne.s32.totalorder %s94, %s95
      %p106 = scmp.eq.s32.totalorder %s23, 0
      %p107 = por %p105, %p106
      %p108 = scmp.ne.s32.totalorder %s94, %s95
      %p109 = scmp.eq.s32.totalorder %s24, 1
      %p110 = por %p108, %p109
      %p112 = scmp.ne.s32.totalorder %s95, %s111
      %p113 = scmp.eq.s32.totalorder %s24, 0
      %p114 = por %p112, %p113
      %s115 = ssub.s32 %s25, %s37
      %s116 = ssub.s32 %s26, %s33
      %s117 = sor.u32 %s115, %s116
      %p118 = scmp.eq.s32.totalorder %s117, 0
      %s120 = sadd.s32 %s119, 1
      %s121 = scalar_select %p118, %s119, %s120
      %p124 = pneg %p118
      %p125 = scmp.eq.s32.totalorder %s18, 1
      %p126 = por %p124, %p125
      %p127 = scmp.ne.s32.totalorder %s119, %s122
      %p128 = scmp.eq.s32.totalorder %s18, 0
      %p129 = por %p127, %p128
      %p130 = scmp.ne.s32.totalorder %s119, %s122
      %p131 = scmp.eq.s32.totalorder %s23, 1
      %p132 = por %p130, %p131
      %p133 = scmp.ne.s32.totalorder %s122, %s123
      %p134 = scmp.eq.s32.totalorder %s23, 0
      %p135 = por %p133, %p134
      %p136 = scmp.ne.s32.totalorder %s122, %s123
      %p137 = scmp.eq.s32.totalorder %s24, 1
      %p138 = por %p136, %p137
      %p140 = scmp.ne.s32.totalorder %s123, %s139
      %p141 = scmp.eq.s32.totalorder %s24, 0
      %p142 = por %p140, %p141
      %s143 = ssub.s32 %s25, %s37
      %s144 = ssub.s32 %s26, %s33
      %s145 = sor.u32 %s143, %s144
      %p146 = scmp.eq.s32.totalorder %s145, 0
      %s148 = sadd.s32 %s147, 1
      %s149 = scalar_select %p146, %s147, %s148
      %p152 = pneg %p146
      %p153 = scmp.eq.s32.totalorder %s18, 1
      %p154 = por %p152, %p153
      %p155 = scmp.ne.s32.totalorder %s147, %s150
      %p156 = scmp.eq.s32.totalorder %s18, 0
      %p157 = por %p155, %p156
      %p158 = scmp.ne.s32.totalorder %s147, %s150
      %p159 = scmp.eq.s32.totalorder %s23, 1
      %p160 = por %p158, %p159
      %p161 = scmp.ne.s32.totalorder %s150, %s151
      %p162 = scmp.eq.s32.totalorder %s23, 0
      %p163 = por %p161, %p162
      %p164 = scmp.ne.s32.totalorder %s150, %s151
      %p165 = scmp.eq.s32.totalorder %s24, 1
      %p166 = por %p164, %p165
      %p168 = scmp.ne.s32.totalorder %s151, %s167
      %p169 = scmp.eq.s32.totalorder %s24, 0
      %p170 = por %p168, %p169
      %s171 = ssub.s32 %s25, %s37
      %s172 = ssub.s32 %s26, %s33
      %s173 = sor.u32 %s171, %s172
      %p174 = scmp.eq.s32.totalorder %s173, 0
      %s176 = sadd.s32 %s175, 1
      %s177 = scalar_select %p174, %s175, %s176
      %p180 = pneg %p174
      %p181 = scmp.eq.s32.totalorder %s18, 1
      %p182 = por %p180, %p181
      %p183 = scmp.ne.s32.totalorder %s175, %s178
      %p184 = scmp.eq.s32.totalorder %s18, 0
      %p185 = por %p183, %p184
      %p186 = scmp.ne.s32.totalorder %s175, %s178
      %p187 = scmp.eq.s32.totalorder %s23, 1
      %p188 = por %p186, %p187
      %p189 = scmp.ne.s32.totalorder %s178, %s179
      %p190 = scmp.eq.s32.totalorder %s23, 0
      %p191 = por %p189, %p190
      %p192 = scmp.ne.s32.totalorder %s178, %s179
      %p193 = scmp.eq.s32.totalorder %s24, 1
      %p194 = por %p192, %p193
      %p196 = scmp.ne.s32.totalorder %s179, %s195
      %p197 = scmp.eq.s32.totalorder %s24, 0
      %p198 = por %p196, %p197
      %p199 = scmp.le.s32.totalorder 1, %s18
      %p200 = scmp.lt.s32.totalorder %s18, 3
      %p201 = pnand %p199, %p200
      %p202 = pneg %p201
      // Predicated region
      $region9: #{tpu_custom_call.1} parent=5 // pred_check
        _
      $region10: #{tpu_custom_call.1} parent=5 // pred_check_branch
        %204 = sbr.rel (%p201) target = $region12
      $region11: #{tpu_custom_call.1} parent=5 // pred_region
        %s205 = ssub.s32 %s18, 1
        // Predicated region
        $region13: #{tpu_custom_call.1} parent=11 // pred_check
          %p206 = pneg %p79
        $region14: #{tpu_custom_call.1} parent=11 // pred_check_branch
          %208 = sbr.rel (%p206) target = $region16
        $region15: #{tpu_custom_call.1} parent=11 // pred_region
          _
        $region16: #{tpu_custom_call.1} parent=11 // pred_fallthru
          _
      $region12: #{tpu_custom_call.1} parent=5 // pred_fallthru
        _
      %p209 = scmp.lt.s32.totalorder %s18, 2
      // Predicated region
      $region17: #{tpu_custom_call.1} parent=5 // pred_check
        %p210 = pneg %p209
      $region18: #{tpu_custom_call.1} parent=5 // pred_check_branch
        %212 = sbr.rel (%p210) target = $region20
      $region19: #{tpu_custom_call.1} parent=5 // pred_region
        // Predicated region
        $region21: #{tpu_custom_call.1} parent=19 // pred_check
          %p213 = pneg %p52
        $region22: #{tpu_custom_call.1} parent=19 // pred_check_branch
          %215 = sbr.rel (%p213) target = $region24
        $region23: #{tpu_custom_call.1} parent=19 // pred_region
          %p216 = scmp.lt.s32.totalorder %s25, 1
          %s217 = scalar_select %p216, %s25, 1
          %p218 = scmp.lt.s32.totalorder %s26, 0
          %s219 = scalar_select %p218, %s26, 0
          %s220 = smul.addr %s217, 2
          %s221 = sadd.s32 %s219, %s220
          %s222 = smul.addr %s221, 8
          %s223 = scalar_lea.vmem %s0, %s222
        $region24: #{tpu_custom_call.1} parent=19 // pred_fallthru
          _
        // Predicated region
        $region25: #{tpu_custom_call.1} parent=19 // pred_check
          %p224 = pneg %p101
        $region26: #{tpu_custom_call.1} parent=19 // pred_check_branch
          %226 = sbr.rel (%p224) target = $region28
        $region27: #{tpu_custom_call.1} parent=19 // pred_region
          %p227 = scmp.lt.s32.totalorder %s25, 1
          %s228 = scalar_select %p227, %s25, 1
          %p229 = scmp.lt.s32.totalorder %s26, 0
          %s230 = scalar_select %p229, %s26, 0
          %s231 = smul.addr %s228, 4
          %s232 = sadd.s32 %s230, %s231
          %s233 = smul.addr %s232, 4
          %s234 = scalar_lea.vmem %s2, %s233
        $region28: #{tpu_custom_call.1} parent=19 // pred_fallthru
          _
      $region20: #{tpu_custom_call.1} parent=5 // pred_fallthru
        _
      %p235 = scmp.le.s32.totalorder 1, %s18
      %p236 = scmp.lt.s32.totalorder %s18, 3
      %p237 = pnand %p235, %p236
      %p238 = pneg %p237
      // Predicated region
      $region29: #{tpu_custom_call.1} parent=5 // pred_check
        _
      $region30: #{tpu_custom_call.1} parent=5 // pred_check_branch
        %240 = sbr.rel (%p237) target = $region32
      $region31: #{tpu_custom_call.1} parent=5 // pred_region
        %s241 = ssub.s32 %s18, 1
        %p242 = scmp.lt.s32.totalorder %s27, 1
        %s243 = scalar_select %p242, %s27, 1
        %p244 = scmp.lt.s32.totalorder %s28, 0
        %s245 = scalar_select %p244, %s28, 0
        %s246 = smul.addr %s243, 2
        %s247 = sadd.s32 %s245, %s246
        %s248 = smul.addr %s247, 8
        %s249 = scalar_lea.vmem %s0, %s248
        %p250 = pneg %p58
        %p251 = pneg %p55
        %p252 = pneg %p79
        %p253 = pneg %p76
        %p254 = scmp.lt.s32.totalorder %s27, 1
        %s255 = scalar_select %p254, %s27, 1
        %p256 = scmp.lt.s32.totalorder %s28, 0
        %s257 = scalar_select %p256, %s28, 0
        %s258 = smul.addr %s255, 4
        %s259 = sadd.s32 %s257, %s258
        %s260 = smul.addr %s259, 4
        %s261 = scalar_lea.vmem %s2, %s260
        %p262 = pneg %p107
        %p263 = pneg %p104
        %p264 = pneg %p135
        %p265 = pneg %p132
        %p266 = scmp.lt.s32.totalorder %s27, 1
        %s267 = scalar_select %p266, %s27, 1
        %p268 = scmp.lt.s32.totalorder %s28, 0
        %s269 = scalar_select %p268, %s28, 0
        %s270 = smul.addr %s267, 2
        %s271 = sadd.s32 %s269, %s270
        %s272 = smul.addr %s271, 8
        %s273 = scalar_lea.vmem %s3, %s272
        %p274 = pneg %p163
        %p275 = pneg %p160
        %s276 = sand.u32 %s150, 1
        %s277 = scalar_lea.sflag [#allocation3], %s276
        %s278 = sand.u32 %s150, 1
        %s279 = scalar_lea.vmem [#allocation2], %s278
        %p280 = pneg %p191
        %p281 = pneg %p188
        %s282 = sand.u32 %s178, 1
        %s283 = scalar_lea.sflag [#allocation5], %s282
        %s284 = sand.u32 %s178, 1
        %s285 = smul.addr %s284, 2
        %s286 = scalar_lea.vmem [#allocation4], %s285
        %p287 = scmp.lt.s32.totalorder %s27, 1
        %s288 = scalar_select %p287, %s27, 1
        %p289 = scmp.lt.s32.totalorder %s28, 0
        %s290 = scalar_select %p289, %s28, 0
        %s291 = smul.addr %s288, 2
        %s292 = sadd.s32 %s290, %s291
        %s293 = smul.addr %s292, 8
        %s294 = scalar_lea.vmem %s0, %s293
        %p295 = scmp.lt.s32.totalorder %s27, 1
        %s296 = scalar_select %p295, %s27, 1
        %p297 = scmp.lt.s32.totalorder %s28, 0
        %s298 = scalar_select %p297, %s28, 0
        %s299 = smul.addr %s296, 4
        %s300 = sadd.s32 %s298, %s299
        %s301 = smul.addr %s300, 4
        %s302 = scalar_lea.vmem %s2, %s301
        %p303 = scmp.lt.s32.totalorder %s27, 1
        %s304 = scalar_select %p303, %s27, 1
        %p305 = scmp.lt.s32.totalorder %s28, 0
        %s306 = scalar_select %p305, %s28, 0
        %s307 = smul.addr %s304, 2
        %s308 = sadd.s32 %s306, %s307
        %s309 = smul.addr %s308, 8
        %s310 = scalar_lea.vmem %s3, %s309
        %v311 = vld [vmem:[%s294] sm:$0xff]
        %v312 = vld [vmem:[%s294 + $0x8] sm:$0xff]
        %v313 = vld [vmem:[%s1] sm:$0xff]
        %v314 = vld [vmem:[%s1 + $0x8] sm:$0xff]
        %v315 = vld [vmem:[%s1 + $0x10] sm:$0xff]
        %v316 = vld [vmem:[%s1 + $0x18] sm:$0xff]
        %v317 = vld [vmem:[%s302] sm:$0xf]
        %v318 = vld [vmem:[%s302 + $0x4] sm:$0xf]
        %v319 = vld [vmem:[%s302 + $0x8] sm:$0xf]
        %v320 = vld [vmem:[%s302 + $0xc] sm:$0xf]
        %v321 = vunpack.c.l.bf16 %v317
        %v322 = vunpack.c.l.bf16 %v318
        %v323 = vunpack.c.l.bf16 %v319
        %v324 = vunpack.c.l.bf16 %v320
        %v325 = vmul.f32 %v313, %v313
        %v326 = vmul.f32 %v314, %v314
        %v327 = vmul.f32 %v315, %v315
        %v328 = vmul.f32 %v316, %v316
        %vm329 = vcmask 130048
        %v330 = vsel %vm329, %v325, 0.0
        %331 = vadd.xlane.f32.xlu0 %v330
        %v332 = vpop.xlane.xlu0 %331
        %v333 = vsel %vm329, %v326, 0.0
        %334 = vadd.xlane.f32.xlu0 %v333
        %v335 = vpop.xlane.xlu0 %334
        %v336 = vsel %vm329, %v327, 0.0
        %337 = vadd.xlane.f32.xlu0 %v336
        %v338 = vpop.xlane.xlu0 %337
        %v339 = vsel %vm329, %v328, 0.0
        %340 = vadd.xlane.f32.xlu0 %v339
        %v341 = vpop.xlane.xlu0 %340
        %v342 = vmul.f32 %v311, %v311
        %v343 = vmul.f32 %v312, %v312
        %vm344 = vcmask 64512
        %v345 = vsel %vm344, %v342, 0.0
        %v346 = vsel %vm344, %v343, 0.0
        %v347 = vadd.f32 %v345, %v346
        %v348 = vrot.slane %v347, 4
        %v349 = vadd.f32 %v347, %v348
        %v350 = vrot.slane %v349, 2
        %v351 = vadd.f32 %v349, %v350
        %v352 = vrot.slane %v351, 1
        %v353 = vadd.f32 %v351, %v352
        %v355 = vsel %vm329, %v313, 0
        %v358 = vsel %vm329, %v314, 0
        %v361 = vsel %vm329, %v315, 0
        %v364 = vsel %vm329, %v316, 0
        %366 = vmatprep.subr.mxu0 0.0
        %367 = vmatpush1.msra.mxu0 0.0
        %368 = vmatprep.subr.mxu0 0.0
        %369 = vmatpush1.msra.mxu0 0.0
        %370 = vmatprep.subr.mxu0 0.0
        %371 = vmatpush1.msra.mxu0 0.0
        %372 = vmatprep.subr.mxu0 0.0
        %373 = vmatpush1.msra.mxu0 0.0
        %374 = vmatprep.subr.mxu0 0.0
        %375 = vmatpush1.msra.mxu0 0.0
        %376 = vmatprep.subr.mxu0 0.0
        %377 = vmatpush1.msra.mxu0 0.0
        %378 = vmatprep.subr.mxu0 0.0
        %379 = vmatpush1.msra.mxu0 0.0
        %380 = vmatprep.subr.mxu0 0.0
        %381 = vmatpush1.msra.mxu0 0.0
        %382 = vmatprep.subr.mxu0 0.0
        %383 = vmatpush1.msra.mxu0 0.0
        %384 = vmatprep.subr.mxu0 0.0
        %385 = vmatpush1.msra.mxu0 0.0
        %386 = vmatprep.subr.mxu0 0.0
        %387 = vmatpush1.msra.mxu0 0.0
        %388 = vmatprep.subr.mxu0 0.0
        %389 = vmatpush1.msra.mxu0 0.0
        %390 = vmatprep.subr.mxu0 0.0
        %391 = vmatpush1.msra.mxu0 0.0
        %392 = vmatprep.subr.mxu0 0.0
        %393 = vmatpush1.msra.mxu0 0.0
        %394 = vmatprep.subr.mxu0 0.0
        %395 = vmatpush1.msra.mxu0 %v312
        %396 = vmatprep.subr.mxu0 0.0
        %397 = vmatpush1.msra.mxu0 %v311
        %398 = vmatprep.subr.mxu0 0.0
        %399 = vmatpush2.msra.mxu0 0.0
        %400 = vmatprep.subr.mxu0 0.0
        %401 = vmatpush2.msra.mxu0 0.0
        %402 = vmatprep.subr.mxu0 0.0
        %403 = vmatpush2.msra.mxu0 0.0
        %404 = vmatprep.subr.mxu0 0.0
        %405 = vmatpush2.msra.mxu0 0.0
        %406 = vmatprep.subr.mxu0 0.0
        %407 = vmatpush2.msra.mxu0 0.0
        %408 = vmatprep.subr.mxu0 0.0
        %409 = vmatpush2.msra.mxu0 0.0
        %410 = vmatprep.subr.mxu0 0.0
        %411 = vmatpush2.msra.mxu0 0.0
        %412 = vmatprep.subr.mxu0 0.0
        %413 = vmatpush2.msra.mxu0 0.0
        %414 = vmatprep.subr.mxu0 0.0
        %415 = vmatpush2.msra.mxu0 0.0
        %416 = vmatprep.subr.mxu0 0.0
        %417 = vmatpush2.msra.mxu0 0.0
        %418 = vmatprep.subr.mxu0 0.0
        %419 = vmatpush2.msra.mxu0 0.0
        %420 = vmatprep.subr.mxu0 0.0
        %421 = vmatpush2.msra.mxu0 0.0
        %422 = vmatprep.subr.mxu0 0.0
        %423 = vmatpush2.msra.mxu0 0.0
        %424 = vmatprep.subr.mxu0 0.0
        %425 = vmatpush2.msra.mxu0 0.0
        %426 = vmatprep.subr.mxu0 0.0
        %427 = vmatpush2.msra.mxu0 0.0
        %428 = vmatprep.subr.mxu0 0.0
        %429 = vmatpush2.msra.mxu0 0.0
        %430 = vmatprep.mubr.f32.mxu0 0.0
        %431 = vmatmul.mubr.f32.gmra.mxu0 %v355
        %v432 = vpop.f32.mrf.mxu0
        %v433 = vadd.f32 0.0, %v432
        %v434 = vpop.f32.mrf.mxu0
        %435 = vmatprep.mubr.f32.mxu0 0.0
        %436 = vmatmul.mubr.f32.gmra.mxu0 %v358
        %v437 = vpop.f32.mrf.mxu0
        %v438 = vadd.f32 0.0, %v437
        %v439 = vpop.f32.mrf.mxu0
        %440 = vmatprep.mubr.f32.mxu0 0.0
        %441 = vmatmul.mubr.f32.gmra.mxu0 %v361
        %v442 = vpop.f32.mrf.mxu0
        %v443 = vadd.f32 0.0, %v442
        %v444 = vpop.f32.mrf.mxu0
        %445 = vmatprep.mubr.f32.mxu0 0.0
        %446 = vmatmul.mubr.f32.gmra.mxu0 %v364
        %v447 = vpop.f32.mrf.mxu0
        %v448 = vadd.f32 0.0, %v447
        %v449 = vpop.f32.mrf.mxu0
        %450 = vdwg.mxu0
        %v451 = vmul.f32 %v433, 2.0
        %v452 = vmul.f32 %v438, 2.0
        %v453 = vmul.f32 %v443, 2.0
        %v454 = vmul.f32 %v448, 2.0
        %v455 = vsub.f32 %v451, %v332
        %v456 = vsub.f32 %v452, %v335
        %v457 = vsub.f32 %v453, %v338
        %v458 = vsub.f32 %v454, %v341
        %v459 = vsub.f32 %v455, %v353
        %v460 = vsub.f32 %v456, %v353
        %v461 = vsub.f32 %v457, %v353
        %v462 = vsub.f32 %v458, %v353
        %v463 = vsel %vm344, %v459, -inf
        %v464 = vsel %vm344, %v460, -inf
        %v465 = vsel %vm344, %v461, -inf
        %v466 = vsel %vm344, %v462, -inf
        %v467 = vmax.f32 %v463, %v464
        %v468 = vmax.f32 %v465, %v466
        %v469 = vmax.f32 %v467, %v468
        %v470 = vrot.slane %v469, 4
        %v471 = vmax.f32 %v469, %v470
        %v472 = vrot.slane %v471, 2
        %v473 = vmax.f32 %v471, %v472
        %v474 = vrot.slane %v473, 1
        %v475 = vmax.f32 %v473, %v474
        %v476 = vsub.f32 %v459, %v475
        %v477 = vsub.f32 %v460, %v475
        %v478 = vsub.f32 %v461, %v475
        %v479 = vsub.f32 %v462, %v475
        %v480 = vmul.f32 %v476, 1.442695
        %v481 = vpow.pop %v480
        %v482 = vmul.f32 %v477, 1.442695
        %v483 = vpow.pop %v482
        %v484 = vmul.f32 %v478, 1.442695
        %v485 = vpow.pop %v484
        %v486 = vmul.f32 %v479, 1.442695
        %v487 = vpow.pop %v486
        %v488 = vsel %vm344, %v481, 0.0
        %v489 = vsel %vm344, %v483, 0.0
        %v490 = vadd.f32 %v488, %v489
        %v491 = vsel %vm344, %v485, 0.0
        %v492 = vadd.f32 %v490, %v491
        %v493 = vsel %vm344, %v487, 0.0
        %v494 = vadd.f32 %v492, %v493
        %v495 = vrot.slane %v494, 4
        %v496 = vadd.f32 %v494, %v495
        %v497 = vrot.slane %v496, 2
        %v498 = vadd.f32 %v496, %v497
        %v499 = vrot.slane %v498, 1
        %v500 = vadd.f32 %v498, %v499
        %v501 = vrcp.pop %v500
        %v502 = vmul.f32 %v481, %v501
        %v503 = vmul.f32 %v483, %v501
        %v504 = vmul.f32 %v485, %v501
        %v505 = vmul.f32 %v487, %v501
        %v506 = vmul.f32 %v502, %v476
        %v507 = vmul.f32 %v503, %v477
        %v508 = vmul.f32 %v504, %v478
        %v509 = vmul.f32 %v505, %v479
        %v510 = vsel %vm344, %v506, 0.0
        %v511 = vsel %vm344, %v507, 0.0
        %v512 = vadd.f32 %v510, %v511
        %v513 = vsel %vm344, %v508, 0.0
        %v514 = vadd.f32 %v512, %v513
        %v515 = vsel %vm344, %v509, 0.0
        %v516 = vadd.f32 %v514, %v515
        %v517 = vrot.slane %v516, 4
        %v518 = vadd.f32 %v516, %v517
        %v519 = vrot.slane %v518, 2
        %v520 = vadd.f32 %v518, %v519
        %v521 = vrot.slane %v520, 1
        %v522 = vadd.f32 %v520, %v521
        %v523 = vlog2.pop %v500
        %v524 = vmul.f32 %v523, 0.6931472
        %v525 = vsub.f32 %v522, %v524
        %v526 = vadd.f32 %v525, 3.465736
        %v527 = vadd.f32 %v522, %v475
        %v528 = vsub.f32 0.0, %v527
        %v529 = vlaneseq
        %v530 = vand.u32 %v529, 127
        %s531 = smul.u32 %s28, 8
        %s532 = ssub.s32 8, %s531
        %v533 = vstv %s532
        %vm534 = vcmp.lt.s32.totalorder %v530, %v533
        %v535 = vsel %vm534, %v526, 0.0
        %v536 = vsel %vm344, %v535, 0.0
        %537 = vadd.xlane.f32.xlu0 %v536
        %v538 = vpop.xlane.xlu0 %537
        %v539 = vsel %vm534, %v528, 0.0
        %v540 = vsel %vm344, %v539, 0.0
        %541 = vadd.xlane.f32.xlu0 %v540
        %v542 = vpop.xlane.xlu0 %541
        %vm543 = vcmask 1040384
        %v544 = vsel %vm543, %v538, %v542
        %546 = vset.pattern.permute.xlu0 0
        %547 = vperm.xlu0 %546, %v544
        %v548 = vpop.permute.xlu0 %547
        %550 = vst [vmem:[%s286] sm:$0x3] %v548
        %v551 = vadd.f32 %v459, %v321
        %v552 = vadd.f32 %v460, %v322
        %v553 = vadd.f32 %v461, %v323
        %v554 = vadd.f32 %v462, %v324
        %v555 = vmul.f32 %v551, 2.0
        %v556 = vmul.f32 %v552, 2.0
        %v557 = vmul.f32 %v553, 2.0
        %v558 = vmul.f32 %v554, 2.0
        %v559 = vsel %vm344, %v555, -inf
        %v560 = vsel %vm344, %v556, -inf
        %v561 = vsel %vm344, %v557, -inf
        %v562 = vsel %vm344, %v558, -inf
        %v563 = vmax.f32 %v559, %v560
        %v564 = vmax.f32 %v561, %v562
        %v565 = vmax.f32 %v563, %v564
        %v566 = vrot.slane %v565, 4
        %v567 = vmax.f32 %v565, %v566
        %v568 = vrot.slane %v567, 2
        %v569 = vmax.f32 %v567, %v568
        %v570 = vrot.slane %v569, 1
        %v571 = vmax.f32 %v569, %v570
        %v572 = vsub.f32 %v555, %v571
        %v573 = vsub.f32 %v556, %v571
        %v574 = vsub.f32 %v557, %v571
        %v575 = vsub.f32 %v558, %v571
        %v576 = vmul.f32 %v572, 1.442695
        %v577 = vpow.pop %v576
        %v578 = vmul.f32 %v573, 1.442695
        %v579 = vpow.pop %v578
        %v580 = vmul.f32 %v574, 1.442695
        %v581 = vpow.pop %v580
        %v582 = vmul.f32 %v575, 1.442695
        %v583 = vpow.pop %v582
        %v584 = vsel %vm344, %v577, 0.0
        %v585 = vsel %vm344, %v579, 0.0
        %v586 = vadd.f32 %v584, %v585
        %v587 = vsel %vm344, %v581, 0.0
        %v588 = vadd.f32 %v586, %v587
        %v589 = vsel %vm344, %v583, 0.0
        %v590 = vadd.f32 %v588, %v589
        %v591 = vrot.slane %v590, 4
        %v592 = vadd.f32 %v590, %v591
        %v593 = vrot.slane %v592, 2
        %v594 = vadd.f32 %v592, %v593
        %v595 = vrot.slane %v594, 1
        %v596 = vadd.f32 %v594, %v595
        %v597 = vrcp.pop %v596
        %v598 = vmul.f32 %v577, %v597
        %v599 = vmul.f32 %v579, %v597
        %v600 = vmul.f32 %v581, %v597
        %v601 = vmul.f32 %v583, %v597
        %v602 = vlaneseq
        %v603 = vshrl.u32 %v602, 7
        %v604 = vadd.s32 %v603, 8
        %v605 = vadd.s32 %v603, 16
        %v606 = vadd.s32 %v603, 24
        %vm607 = vcmp.eq.f32.partialorder %v555, %v571
        %vm608 = vcmp.eq.f32.partialorder %v556, %v571
        %vm609 = vcmp.eq.f32.partialorder %v557, %v571
        %vm610 = vcmp.eq.f32.partialorder %v558, %v571
        %v611 = vsel %vm607, %v603, 32
        %v612 = vsel %vm608, %v604, 32
        %v613 = vsel %vm609, %v605, 32
        %v614 = vsel %vm610, %v606, 32
        %v615 = vsel %vm344, %v611, 2147483647
        %v616 = vsel %vm344, %v612, 2147483647
        %v617 = vsel %vm344, %v613, 2147483647
        %v618 = vsel %vm344, %v614, 2147483647
        %vm619 = vcmp.lt.s32.totalorder %v615, %v616
        %v620 = vsel %vm619, %v615, %v616
        %vm621 = vcmp.lt.s32.totalorder %v617, %v618
        %v622 = vsel %vm621, %v617, %v618
        %vm623 = vcmp.lt.s32.totalorder %v620, %v622
        %v624 = vsel %vm623, %v620, %v622
        %v625 = vrot.slane %v624, 4
        %vm626 = vcmp.lt.s32.totalorder %v624, %v625
        %v627 = vsel %vm626, %v624, %v625
        %v628 = vrot.slane %v627, 2
        %vm629 = vcmp.lt.s32.totalorder %v627, %v628
        %v630 = vsel %vm629, %v627, %v628
        %v631 = vrot.slane %v630, 1
        %vm632 = vcmp.lt.s32.totalorder %v630, %v631
        %v633 = vsel %vm632, %v630, %v631
        %vm634 = vcmask 57344
        %635 = vst.msk [vmem:[%s279] sm:$0x1] %vm634, %v633
        %636 = vxpose.xlu0.b32.start [1/16] %v313, 128
        %637 = vxpose.xlu0.b32.cont [2/16] %v314, 128
        %638 = vxpose.xlu0.b32.cont [3/16] %v315, 128
        %639 = vxpose.xlu0.b32.cont [4/16] %v316, 128
        %640 = vxpose.xlu0.b32.cont [5/16] 0.0, 128
        %641 = vxpose.xlu0.b32.cont [6/16] 0.0, 128
        %642 = vxpose.xlu0.b32.cont [7/16] 0.0, 128
        %643 = vxpose.xlu0.b32.cont [8/16] 0.0, 128
        %644 = vxpose.xlu0.b32.cont [9/16] 0.0, 128
        %645 = vxpose.xlu0.b32.cont [10/16] 0.0, 128
        %646 = vxpose.xlu0.b32.cont [11/16] 0.0, 128
        %647 = vxpose.xlu0.b32.cont [12/16] 0.0, 128
        %648 = vxpose.xlu0.b32.cont [13/16] 0.0, 128
        %649 = vxpose.xlu0.b32.cont [14/16] 0.0, 128
        %650 = vxpose.xlu0.b32.cont [15/16] 0.0, 128
        %651 = vxpose.xlu0.b32.end [16/16] 0.0, 128
        %v652 = vpop.trf.xlu0
        %v653 = vpop.trf.xlu0
        %v654 = vpop.trf.xlu0
        %v655 = vpop.trf.xlu0
        %v656 = vpop.trf.xlu0
        %v657 = vpop.trf.xlu0
        %v658 = vpop.trf.xlu0
        %v659 = vpop.trf.xlu0
        %v660 = vpop.trf.xlu0
        %v661 = vpop.trf.xlu0
        %v662 = vpop.trf.xlu0
        %v663 = vpop.trf.xlu0
        %v664 = vpop.trf.xlu0
        %v665 = vpop.trf.xlu0
        %v666 = vpop.trf.xlu0
        %v667 = vpop.trf.xlu0
        %vm668 = vcmask 261120
        %v670 = vsel %vm668, %v652, 0
        %v673 = vsel %vm668, %v653, 0
        %675 = vmatprep.subr.mxu0 0.0
        %676 = vmatpush1.msra.mxu0 0.0
        %677 = vmatprep.subr.mxu0 0.0
        %678 = vmatpush1.msra.mxu0 0.0
        %679 = vmatprep.subr.mxu0 0.0
        %680 = vmatpush1.msra.mxu0 0.0
        %681 = vmatprep.subr.mxu0 0.0
        %682 = vmatpush1.msra.mxu0 0.0
        %683 = vmatprep.subr.mxu0 0.0
        %684 = vmatpush1.msra.mxu0 0.0
        %685 = vmatprep.subr.mxu0 0.0
        %686 = vmatpush1.msra.mxu0 0.0
        %687 = vmatprep.subr.mxu0 0.0
        %688 = vmatpush1.msra.mxu0 0.0
        %689 = vmatprep.subr.mxu0 0.0
        %690 = vmatpush1.msra.mxu0 0.0
        %691 = vmatprep.subr.mxu0 0.0
        %692 = vmatpush1.msra.mxu0 0.0
        %693 = vmatprep.subr.mxu0 0.0
        %694 = vmatpush1.msra.mxu0 0.0
        %695 = vmatprep.subr.mxu0 0.0
        %696 = vmatpush1.msra.mxu0 0.0
        %697 = vmatprep.subr.mxu0 0.0
        %698 = vmatpush1.msra.mxu0 0.0
        %699 = vmatprep.subr.mxu0 0.0
        %700 = vmatpush1.msra.mxu0 %v601
        %701 = vmatprep.subr.mxu0 0.0
        %702 = vmatpush1.msra.mxu0 %v600
        %703 = vmatprep.subr.mxu0 0.0
        %704 = vmatpush1.msra.mxu0 %v599
        %705 = vmatprep.subr.mxu0 0.0
        %706 = vmatpush1.msra.mxu0 %v598
        %707 = vmatprep.subr.mxu0 0.0
        %708 = vmatpush2.msra.mxu0 0.0
        %709 = vmatprep.subr.mxu0 0.0
        %710 = vmatpush2.msra.mxu0 0.0
        %711 = vmatprep.subr.mxu0 0.0
        %712 = vmatpush2.msra.mxu0 0.0
        %713 = vmatprep.subr.mxu0 0.0
        %714 = vmatpush2.msra.mxu0 0.0
        %715 = vmatprep.subr.mxu0 0.0
        %716 = vmatpush2.msra.mxu0 0.0
        %717 = vmatprep.subr.mxu0 0.0
        %718 = vmatpush2.msra.mxu0 0.0
        %719 = vmatprep.subr.mxu0 0.0
        %720 = vmatpush2.msra.mxu0 0.0
        %721 = vmatprep.subr.mxu0 0.0
        %722 = vmatpush2.msra.mxu0 0.0
        %723 = vmatprep.subr.mxu0 0.0
        %724 = vmatpush2.msra.mxu0 0.0
        %725 = vmatprep.subr.mxu0 0.0
        %726 = vmatpush2.msra.mxu0 0.0
        %727 = vmatprep.subr.mxu0 0.0
        %728 = vmatpush2.msra.mxu0 0.0
        %729 = vmatprep.subr.mxu0 0.0
        %730 = vmatpush2.msra.mxu0 0.0
        %731 = vmatprep.subr.mxu0 0.0
        %732 = vmatpush2.msra.mxu0 0.0
        %733 = vmatprep.subr.mxu0 0.0
        %734 = vmatpush2.msra.mxu0 0.0
        %735 = vmatprep.subr.mxu0 0.0
        %736 = vmatpush2.msra.mxu0 0.0
        %737 = vmatprep.subr.mxu0 0.0
        %738 = vmatpush2.msra.mxu0 0.0
        %739 = vmatprep.mubr.f32.mxu0 0.0
        %740 = vmatmul.mubr.f32.gmra.mxu0 %v670
        %v741 = vpop.f32.mrf.mxu0
        %v742 = vadd.f32 0.0, %v741
        %v743 = vpop.f32.mrf.mxu0
        %744 = vmatprep.mubr.f32.mxu0 0.0
        %745 = vmatmul.mubr.f32.gmra.mxu0 %v673
        %v746 = vpop.f32.mrf.mxu0
        %v747 = vadd.f32 0.0, %v746
        %v748 = vpop.f32.mrf.mxu0
        %749 = vdwg.mxu0
        %750 = vst.msk [vmem:[%s310] sm:$0xff] %vm344, %v742
        %751 = vst.msk [vmem:[%s310 + $0x8] sm:$0xff] %vm344, %v747
        %p752 = scmp.lt.s32.totalorder %s27, 1
        %s753 = scalar_select %p752, %s27, 1
        %p754 = scmp.lt.s32.totalorder %s28, 0
        %s755 = scalar_select %p754, %s28, 0
        %s756 = smul.addr %s753, 2
        %s757 = sadd.s32 %s755, %s756
        %s758 = smul.addr %s757, 8
        %s759 = scalar_lea.vmem %s3, %s758
        %s760 = sand.u32 %s150, 1
        %s761 = scalar_lea.sflag [#allocation3], %s760
        %s762 = sand.u32 %s150, 1
        %s763 = scalar_lea.vmem [#allocation2], %s762
        %s764 = sand.u32 %s178, 1
        %s765 = scalar_lea.sflag [#allocation5], %s764
        %s766 = sand.u32 %s178, 1
        %s767 = smul.addr %s766, 2
        %s768 = scalar_lea.vmem [#allocation4], %s767
        // Predicated region
        $region33: #{tpu_custom_call.1} parent=31 // pred_check
          %p769 = pneg %p132
        $region34: #{tpu_custom_call.1} parent=31 // pred_check_branch
          %771 = sbr.rel (%p769) target = $region36
        $region35: #{tpu_custom_call.1} parent=31 // pred_region
          _
        $region36: #{tpu_custom_call.1} parent=31 // pred_fallthru
          _
        // Predicated region
        $region37: #{tpu_custom_call.1} parent=31 // pred_check
          %p772 = pneg %p160
        $region38: #{tpu_custom_call.1} parent=31 // pred_check_branch
          %774 = sbr.rel (%p772) target = $region40
        $region39: #{tpu_custom_call.1} parent=31 // pred_region
          %s776 = ssub.s32 16, 16
          %777 = vsyncadd %s761, %s776
          %s778 = sadd.s32 %s28, %s27
          %s779 = smul.addr %s778, 16
          %s780 = scalar_lea.hbm %s4, %s779
          %s782 = sshll.u32 %s763, 4
          %s783 = int_to_ptr.vmem [resolvable:$true] %s782
          %785 = dma.vmem_to_hbm [thread:$0]  %s783, 16, %s780, %s761
        $region40: #{tpu_custom_call.1} parent=31 // pred_fallthru
          _
        // Predicated region
        $region41: #{tpu_custom_call.1} parent=31 // pred_check
          %p786 = pneg %p188
        $region42: #{tpu_custom_call.1} parent=31 // pred_check_branch
          %788 = sbr.rel (%p786) target = $region44
        $region43: #{tpu_custom_call.1} parent=31 // pred_region
          %s790 = ssub.s32 32, 32
          %791 = vsyncadd %s765, %s790
          %s792 = sadd.s32 %s28, %s27
          %s793 = smul.addr %s792, 32
          %s794 = scalar_lea.hbm %s5, %s793
          %s796 = sshll.u32 %s768, 4
          %s797 = int_to_ptr.vmem [resolvable:$true] %s796
          %799 = dma.vmem_to_hbm [thread:$0]  %s797, 32, %s794, %s765
        $region44: #{tpu_custom_call.1} parent=31 // pred_fallthru
          _
      $region32: #{tpu_custom_call.1} parent=5 // pred_fallthru
        _
      %p800 = scmp.le.s32.totalorder 2, %s18
      // Predicated region
      $region45: #{tpu_custom_call.1} parent=5 // pred_check
        %p801 = pneg %p800
      $region46: #{tpu_custom_call.1} parent=5 // pred_check_branch
        %803 = sbr.rel (%p801) target = $region48
      $region47: #{tpu_custom_call.1} parent=5 // pred_region
        %s804 = ssub.s32 %s18, 2
        // Predicated region
        $region49: #{tpu_custom_call.1} parent=47 // pred_check
          %p805 = pneg %p138
        $region50: #{tpu_custom_call.1} parent=47 // pred_check_branch
          %807 = sbr.rel (%p805) target = $region52
        $region51: #{tpu_custom_call.1} parent=47 // pred_region
          %p808 = scmp.lt.s32.totalorder %s29, 1
          %s809 = scalar_select %p808, %s29, 1
          %p810 = scmp.lt.s32.totalorder %s30, 0
          %s811 = scalar_select %p810, %s30, 0
          %s812 = smul.addr %s809, 2
          %s813 = sadd.s32 %s811, %s812
          %s814 = smul.addr %s813, 8
          %s815 = scalar_lea.vmem %s3, %s814
        $region52: #{tpu_custom_call.1} parent=47 // pred_fallthru
          _
        // Predicated region
        $region53: #{tpu_custom_call.1} parent=47 // pred_check
          %p816 = pneg %p166
        $region54: #{tpu_custom_call.1} parent=47 // pred_check_branch
          %818 = sbr.rel (%p816) target = $region56
        $region55: #{tpu_custom_call.1} parent=47 // pred_region
          %s819 = sand.u32 %s151, 1
          %s820 = scalar_lea.sflag [#allocation3], %s819
          %s821 = sand.u32 %s151, 1
          %s822 = scalar_lea.vmem [#allocation2], %s821
          %823 = dma.done %s820, 16
        $region56: #{tpu_custom_call.1} parent=47 // pred_fallthru
          _
        // Predicated region
        $region57: #{tpu_custom_call.1} parent=47 // pred_check
          %p824 = pneg %p194
        $region58: #{tpu_custom_call.1} parent=47 // pred_check_branch
          %826 = sbr.rel (%p824) target = $region60
        $region59: #{tpu_custom_call.1} parent=47 // pred_region
          %s827 = sand.u32 %s179, 1
          %s828 = scalar_lea.sflag [#allocation5], %s827
          %s829 = sand.u32 %s179, 1
          %s830 = smul.addr %s829, 2
          %s831 = scalar_lea.vmem [#allocation4], %s830
          %832 = dma.done %s828, 32
        $region60: #{tpu_custom_call.1} parent=47 // pred_fallthru
          _
      $region48: #{tpu_custom_call.1} parent=5 // pred_fallthru
        _
    $region6: #{tpu_custom_call.1} parent=1 // loop_footer
      %s22 = sadd.s32 1, %s18
    $region7: #{tpu_custom_call.1} parent=1 // loop_footer_branch
      %17 = sbr.rel target = $region3
    $region8: #{tpu_custom_call.1} parent=1 // loop_exit
      _
    %833 = vsyncpa [#allocation3], 1
    %s834 = scalar_lea.sflag [#allocation3], 1
    %835 = vsyncpa %s834, 1
    %836 = vsyncpa [#allocation5], 1
    %s837 = scalar_lea.sflag [#allocation5], 1
    %838 = vsyncpa %s837, 1

</llo_original>
